<compile_context>
chip_gen: v6e
topology: v6e:2x2x1
jax: 0.10.0
libtpu: 0.0.40
codegen_flags: <defaults>
</compile_context>

<pallas_src>
import functools

import jax
import jax.numpy as jnp
from jax.experimental import pallas as pl
from jax.experimental.pallas import tpu as pltpu

LRELU_SLOPE = 0.01  # F.leaky_relu default negative_slope (matches the spec)


def _round_up(x, m):
    return (x + m - 1) // m * m


# ---------------------------------------------------------------------------
# Pallas kernels: tiled GEMM + bias + optional leaky_relu
# ---------------------------------------------------------------------------

def _gemm_direct_kernel(x_ref, w_ref, b_ref, o_ref, *, apply_act):
    """Single reduction block: out = act(x @ w + b), stored directly."""
    out = jnp.dot(x_ref[...], w_ref[...], preferred_element_type=jnp.float32)
    out = out + b_ref[...]                       # (TM, TN) f32 + (1, TN) f32
    if apply_act:
        out = jnp.where(out > 0, out, LRELU_SLOPE * out)
    o_ref[...] = out.astype(o_ref.dtype)


def _gemm_acc_kernel(x_ref, w_ref, b_ref, o_ref, acc_ref, *, apply_act):
    """Streamed reduction: f32 VMEM accumulator, epilogue on last K step."""
    @pl.when(pl.program_id(2) == 0)
    def _():
        acc_ref[...] = jnp.zeros_like(acc_ref)

    acc_ref[...] += jnp.dot(x_ref[...], w_ref[...],
                            preferred_element_type=jnp.float32)

    @pl.when(pl.program_id(2) == pl.num_programs(2) - 1)
    def _():
        out = acc_ref[...] + b_ref[...]
        if apply_act:
            out = jnp.where(out > 0, out, LRELU_SLOPE * out)
        o_ref[...] = out.astype(o_ref.dtype)


def matmul_bias_act(x, w2, b2, *, apply_act):
    """(M, K) @ (K, Cout_pad) + bias, optional leaky_relu. Lane axis = Cout.

    x: (M, K) bf16 (K % 128 == 0); w2: (K, Cout_pad) bf16; b2: (1, Cout_pad) f32.
    Returns (M, Cout_pad) bf16 (padded channels are exactly zero + zero bias).
    """
    M, K = x.shape
    Kw, Cout_p = w2.shape
    assert K == Kw and Cout_p % 128 == 0 and K % 128 == 0

    # ---- tile selection ----
    TM = min(1024, _round_up(M, 8))               # big M tiles, masked edge block
    w_bytes = K * Cout_p * 2                      # bf16 weight footprint

    if K <= 1024:
        TK = K                                    # whole reduction in one block
        # small weights stay fully VMEM-resident across all M tiles
        TN = Cout_p if w_bytes <= (2 << 20) else min(Cout_p, 512)
    else:
        # heavy layers (K = 2560 / 5120 / 3072): stream K, keep tiles within
        # every generation's default scoped VMEM (incl. v7x's 32 MiB budget).
        TK = 512 if K % 512 == 0 else (256 if K % 256 == 0 else 128)
        TN = min(Cout_p, 512)

    gm = pl.cdiv(M, TM)
    gn = Cout_p // TN
    gk = K // TK

    out_shape = jax.ShapeDtypeStruct((M, Cout_p), jnp.bfloat16)

    if gk == 1:
        kernel = functools.partial(_gemm_direct_kernel, apply_act=apply_act)
        grid = (gm, gn)
        in_specs = [
            pl.BlockSpec((TM, TK), lambda i, j: (i, 0)),     # activations
            pl.BlockSpec((TK, TN), lambda i, j: (0, j)),     # weight (resident)
            pl.BlockSpec((1, TN), lambda i, j: (0, j)),      # bias
        ]
        out_specs = pl.BlockSpec((TM, TN), lambda i, j: (i, j))
        scratch = []
        dims = ("parallel", "parallel")
    else:
        kernel = functools.partial(_gemm_acc_kernel, apply_act=apply_act)
        grid = (gm, gn, gk)
        in_specs = [
            pl.BlockSpec((TM, TK), lambda i, j, k: (i, k)),  # activations
            pl.BlockSpec((TK, TN), lambda i, j, k: (k, j)),  # weight slab
            pl.BlockSpec((1, TN), lambda i, j, k: (0, j)),   # bias
        ]
        out_specs = pl.BlockSpec((TM, TN), lambda i, j, k: (i, j))
        scratch = [pltpu.VMEM((TM, TN), jnp.float32)]
        dims = ("parallel", "parallel", "arbitrary")

    return pl.pallas_call(
        kernel,
        out_shape=out_shape,
        grid_spec=pltpu.PrefetchScalarGridSpec(
            num_scalar_prefetch=0,
            grid=grid,
            in_specs=in_specs,
            out_specs=out_specs,
            scratch_shapes=scratch,
        ),
        compiler_params=pltpu.CompilerParams(dimension_semantics=dims),
    )(x, w2, b2)


# ---------------------------------------------------------------------------
# Conv2d((k,1),(stride,1),padding=(pad,0)) as im2col + GEMM
# ---------------------------------------------------------------------------

def conv_layer(x_hnc, w2, b2, *, k, stride, pad, apply_act):
    """x_hnc: (H, N, C_pad) bf16. Returns (H_out, N, Cout_pad) bf16."""
    H, N, C = x_hnc.shape
    x_pad = jnp.pad(x_hnc, ((pad, pad), (0, 0), (0, 0)))      # zero-pad on H
    H_out = (H + 2 * pad - k) // stride + 1

    # im2col (tap-major order ki*C + ci, matching the weight flattening).
    # TODO(synk): for the stride-1 layers (layer 5 / conv_post) this duplicates
    # the activation k-fold; a tap-offset x index_map (pl.Element rows) on the
    # un-duplicated (H*N, C) activation would remove that HBM traffic.
    cols = [x_pad[ki: ki + (H_out - 1) * stride + 1: stride] for ki in range(k)]
    x_col = jnp.concatenate(cols, axis=-1).reshape(H_out * N, k * C)

    K_pad = w2.shape[0]
    if x_col.shape[1] != K_pad:          # only layer 1 (k*Cin = 5 -> 128)
        x_col = jnp.pad(x_col, ((0, 0), (0, K_pad - x_col.shape[1])))

    out = matmul_bias_act(x_col, w2, b2, apply_act=apply_act)
    return out.reshape(H_out, N, w2.shape[1])


# ---------------- parameter init + one-time preparation ---------------------

def init_discriminator_p_params(key, kernel_size=5):
    """Raw (torch-layout) weights for one DiscriminatorP; weight_norm is only a
    reparameterization, so the effective weight is initialized directly."""
    chans = [(1, 32), (32, 128), (128, 512), (512, 1024), (1024, 1024)]
    params = []
    for cin, cout in chans:
        key, k1, k2 = jax.random.split(key, 3)
        w = jax.random.normal(k1, (cout, cin, kernel_size), jnp.float32)
        w = w / jnp.sqrt(float(cin * kernel_size))
        b = jax.random.normal(k2, (cout,), jnp.float32) * 0.01
        params.append((w, b))
    # conv_post: Conv2d(1024, 1, (3,1), 1, padding=(1,0))
    key, k1, k2 = jax.random.split(key, 3)
    w = jax.random.normal(k1, (1, 1024, 3), jnp.float32) / jnp.sqrt(1024.0 * 3.0)
    b = jax.random.normal(k2, (1,), jnp.float32) * 0.01
    params.append((w, b))
    return params


def prepare_discriminator_params(raw_params):
    """Flatten / pad / cast each layer's weight ONCE:
       w2: (round_up(k*Cin_pad,128), round_up(Cout,128)) bf16, b2: (1, Cout_pad) f32.
    Channel dims are padded to multiples of 128 so activations stay
    channel-padded between layers with zero contribution from the padding."""
    prepared = []
    cin_pad = 1  # layer-1 input is the raw 1-channel audio (not padded)
    for (w, b) in raw_params:
        cout, cin, k = w.shape
        cout_pad = _round_up(cout, 128)
        w_t = jnp.transpose(w, (2, 1, 0))                      # (k, cin, cout)
        w_t = jnp.pad(w_t, ((0, 0), (0, cin_pad - cin), (0, cout_pad - cout)))
        w2 = w_t.reshape(k * cin_pad, cout_pad)
        k_pad = _round_up(k * cin_pad, 128)
        if k_pad != k * cin_pad:
            w2 = jnp.pad(w2, ((0, k_pad - k * cin_pad), (0, 0)))
        w2 = w2.astype(jnp.bfloat16)
        b2 = jnp.pad(b, (0, cout_pad - cout)).astype(jnp.float32).reshape(1, cout_pad)
        prepared.append({"w2": w2, "b2": b2, "k": k, "cout": cout})
        cin_pad = cout_pad
    return prepared


# ------------- DiscriminatorP / MultiPeriodDiscriminator forward -------------

def discriminator_p_forward(y, period, params):
    """y: (B, 1, T) f32. Returns (logits (B, H_out*P) f32, fmaps NCHW bf16)."""
    b, c, t = y.shape
    if t % period != 0:
        n_pad = period - (t % period)
        y = jnp.pad(y, ((0, 0), (0, 0), (0, n_pad)), mode='reflect')
        t = t + n_pad
    H = t // period

    # NCHW (B, C, H, P) -> channels-last (H, N=B*P, C)
    x = jnp.transpose(y.reshape(b, c, H, period), (2, 0, 3, 1))
    x = x.reshape(H, b * period, c).astype(jnp.bfloat16)

    # (stride, pad, leaky_relu) per layer: four (5,1)/stride-3, one (5,1)/stride-1,
    # then conv_post (3,1)/stride-1 without activation.
    cfgs = [(3, 2, True), (3, 2, True), (3, 2, True), (3, 2, True),
            (1, 2, True), (1, 1, False)]
    # TODO(synk): conv_post (Cout=1, k=3, stride=1) could be fused into layer
    # 5's epilogue (VPU reduction) instead of its own lane-padded GEMM.
    fmap = []
    for p, (stride, pad, act) in zip(params, cfgs):
        x = conv_layer(x, p["w2"], p["b2"], k=p["k"],
                       stride=stride, pad=pad, apply_act=act)
        Hc, Nc, Cp = x.shape
        fm = x.reshape(Hc, b, period, Cp)[..., :p["cout"]]     # drop padded chans
        fmap.append(jnp.transpose(fm, (1, 3, 0, 2)))           # (B, C, H, P) bf16

    # torch.flatten(x, 1, -1) on (B, 1, H, P)
    logits = fmap[-1].reshape(b, -1).astype(jnp.float32)
    return logits, fmap


def multi_period_discriminator_forward(y, periods, all_params):
    # The 5 period-discriminators use distinct weights, so their GEMMs run as
    # independent kernels (m / Cout grid axes are "parallel" for megacore).
    y_d_rs, fmap_rs = [], []
    for period, params in zip(periods, all_params):
        y_d_r, fmap_r = discriminator_p_forward(y, period, params)
        y_d_rs.append(y_d_r)
        fmap_rs.append(fmap_r)
    return y_d_rs, fmap_rs


if __name__ == "__main__":
    key = jax.random.PRNGKey(0)
    key, xk = jax.random.split(key)

    B, C, T = 2, 1, 16                     # small (B, 1, T) audio-like input
    y = jax.random.normal(xk, (B, C, T), jnp.float32)

    periods = [2, 3, 5, 7, 11]
    all_params = []
    for _ in periods:
        key, pk = jax.random.split(key)
        raw = init_discriminator_p_params(pk)
        all_params.append(prepare_discriminator_params(raw))   # one-time prep

    y_d_rs, fmap_rs = multi_period_discriminator_forward(y, periods, all_params)
    jax.block_until_ready((y_d_rs, fmap_rs))
    print("KERNEL_OK")
</pallas_src>

<mosaic_0001>
module attributes {stable_mosaic.version = 11 : i64} {
  func.func @_gemm_direct_kernel(%arg0: i32, %arg1: i32, %arg2: memref<16x128xbf16, #tpu.memory_space<vmem>>, %arg3: memref<128x128xbf16, #tpu.memory_space<vmem>>, %arg4: memref<1x128xf32, #tpu.memory_space<vmem>>, %arg5: memref<16x128xbf16, #tpu.memory_space<vmem>>) attributes {dimension_semantics = [#tpu.dimension_semantics<parallel>, #tpu.dimension_semantics<parallel>], iteration_bounds = array<i64: 1, 1>, scalar_prefetch = 0 : i64, scratch_operands = 0 : i64, tpu.core_type = #tpu.core_type<tc>, window_params = [{transform_indices = @transform_0, window_bounds = array<i64: 16, 128>}, {transform_indices = @transform_1, window_bounds = array<i64: 128, 128>}, {transform_indices = @transform_2, window_bounds = array<i64: 1, 128>}, {transform_indices = @transform_3, window_bounds = array<i64: 16, 128>}]} {
    %c0 = arith.constant 0 : index
    %c0_0 = arith.constant 0 : index
    %0 = vector.load %arg2[%c0, %c0_0] : memref<16x128xbf16, #tpu.memory_space<vmem>>, vector<16x128xbf16>
    %c0_1 = arith.constant 0 : index
    %c0_2 = arith.constant 0 : index
    %1 = vector.load %arg3[%c0_1, %c0_2] : memref<128x128xbf16, #tpu.memory_space<vmem>>, vector<128x128xbf16>
    %cst = arith.constant dense<0.000000e+00> : vector<16x128xf32>
    %2 = tpu.matmul %0, %1, %cst {dimension_numbers = #tpu.dot_dimension_numbers<[1], [0], [0], [1], [0, 0, 1, 1], [], []>} : vector<16x128xbf16>, vector<128x128xbf16>, vector<16x128xf32> -> vector<16x128xf32>
    %c0_3 = arith.constant 0 : index
    %c0_4 = arith.constant 0 : index
    %3 = vector.load %arg4[%c0_3, %c0_4] : memref<1x128xf32, #tpu.memory_space<vmem>>, vector<1x128xf32>
    %4 = vector.broadcast %3 : vector<1x128xf32> to vector<16x128xf32>
    %5 = arith.addf %2, %4 : vector<16x128xf32>
    %cst_5 = arith.constant 0.000000e+00 : f32
    %6 = vector.broadcast %cst_5 : f32 to vector<16x128xf32>
    %7 = arith.cmpf ogt, %5, %6 : vector<16x128xf32>
    %cst_6 = arith.constant 0.00999999977 : f32
    %8 = vector.broadcast %cst_6 : f32 to vector<16x128xf32>
    %9 = arith.mulf %8, %5 : vector<16x128xf32>
    %10 = arith.select %7, %5, %9 : vector<16x128xi1>, vector<16x128xf32>
    %11 = arith.truncf %10 : vector<16x128xf32> to vector<16x128xbf16>
    %c0_7 = arith.constant 0 : index
    %c0_8 = arith.constant 0 : index
    %12 = vector.load %arg5[%c0_7, %c0_8] : memref<16x128xbf16, #tpu.memory_space<vmem>>, vector<16x128xbf16>
    tpu.vector_store %arg5[%c0_7, %c0_8], %11 {strides = array<i32>} : memref<16x128xbf16, #tpu.memory_space<vmem>>, vector<16x128xbf16>,
    return
  }
  func.func @transform_0(%arg0: i32, %arg1: i32) -> (i32, i32) {
    %c0_i32 = arith.constant 0 : i32
    %c0_i32_0 = arith.constant 0 : i32
    return %arg0, %c0_i32 : i32, i32
  }
  func.func @transform_1(%arg0: i32, %arg1: i32) -> (i32, i32) {
    %c0_i32 = arith.constant 0 : i32
    %c0_i32_0 = arith.constant 0 : i32
    return %c0_i32, %arg1 : i32, i32
  }
  func.func @transform_2(%arg0: i32, %arg1: i32) -> (i32, i32) {
    %c0_i32 = arith.constant 0 : i32
    %c0_i32_0 = arith.constant 0 : i32
    return %c0_i32, %arg1 : i32, i32
  }
  func.func @transform_3(%arg0: i32, %arg1: i32) -> (i32, i32) {
    %c0_i32 = arith.constant 0 : i32
    return %arg0, %arg1 : i32, i32
  }
}

</mosaic_0001>

<llo_original>
// kernel: tpu_custom_call.1
$region0: #{tpu_custom_call.1}
  #allocation0 [shape = 'u32[]', space=smem, size = 0x4, offset = 0x4, fixed_abs, tag = 'smem constant byte address 0x4 - core index']
  #allocation1 [shape = 'u32[144,128]{1,0:T(1,128)}', space=vmem, size = 0x12000, scoped, tag = 'internal scratch']
  %s0 = inlined_call_operand.hbm [shape: bf16[12,128], index: 0, kind: input, shape index: {}]
  %s1 = inlined_call_operand.hbm [shape: bf16[128,128], index: 1, kind: input, shape index: {}]
  %s2 = inlined_call_operand.vmem [shape: f32[1,128], index: 2, kind: input, shape index: {}]
  %s3 = inlined_call_operand.hbm [shape: bf16[12,128], index: 3, kind: output, shape index: {}]
  %s4 = sld [smem:[#allocation0]]
  $region30: #{tpu_custom_call.1} parent=0
    _
  %s6 = ssub.s32 1, %s4
  %s7 = scalar_select 0, %s6, %s4
  $region1: #{tpu_custom_call.1} parent=0
    #allocation2 [shape = 'u8[4096]{0}', space=vmem, size = 0x1000, scoped, tag = 'input window, operand 0, single buffered']
    #allocation3 [shape = 's32[1]{0}', space=sflag, size = 0x4, scoped, tag = 'scoped memory for tpu_custom_call.1']
    #allocation4 [shape = 's32[1]{0}', space=sflag, size = 0x4, scoped, tag = 'scoped memory for tpu_custom_call.1']
    #allocation5 [shape = 'u8[32768]{0}', space=vmem, size = 0x8000, scoped, tag = 'input window, operand 1, single buffered']
    #allocation6 [shape = 's32[1]{0}', space=sflag, size = 0x4, scoped, tag = 'scoped memory for tpu_custom_call.1']
    #allocation7 [shape = 'u8[4096]{0}', space=vmem, size = 0x1000, scoped, tag = 'output window, operand 0, single buffered']
    %8 = vsyncpa [#allocation3], 0
    %9 = vsyncpa [#allocation6], 0
    %10 = vsyncpa [#allocation4], 0
    // Predicated region
    $region2: #{tpu_custom_call.1} parent=1 // pred_check
      _
    $region3: #{tpu_custom_call.1} parent=1 // pred_check_branch
      %12 = sbr.rel (0) target = $region5
    $region4: #{tpu_custom_call.1} parent=1 // pred_region
      %s14 = ssub.s32 128, 128
      %15 = vsyncadd [#allocation3], %s14
      %s16 = sshll.u32 [#allocation2], 4
      %s17 = int_to_ptr.vmem [resolvable:$true] %s16
      %22 = dma.hbm_to_vmem [thread:$0]  %s0, 128, %s17, [#allocation3], 64, 64, 4
    $region5: #{tpu_custom_call.1} parent=1 // pred_fallthru
      _
    // Predicated region
    $region6: #{tpu_custom_call.1} parent=1 // pred_check
      _
    $region7: #{tpu_custom_call.1} parent=1 // pred_check_branch
      %24 = sbr.rel (0) target = $region9
    $region8: #{tpu_custom_call.1} parent=1 // pred_region
      %s26 = ssub.s32 1024, 1024
      %27 = vsyncadd [#allocation6], %s26
      %s28 = sshll.u32 [#allocation5], 4
      %s29 = int_to_ptr.vmem [resolvable:$true] %s28
      %34 = dma.hbm_to_vmem [thread:$0]  %s1, 1024, %s29, [#allocation6], 64, 64, 4
    $region9: #{tpu_custom_call.1} parent=1 // pred_fallthru
      _
    // Predicated region
    $region10: #{tpu_custom_call.1} parent=1 // pred_check
      _
    $region11: #{tpu_custom_call.1} parent=1 // pred_check_branch
      %36 = sbr.rel (0) target = $region13
    $region12: #{tpu_custom_call.1} parent=1 // pred_region
      _
    $region13: #{tpu_custom_call.1} parent=1 // pred_fallthru
      _
    // Predicated region
    $region14: #{tpu_custom_call.1} parent=1 // pred_check
      _
    $region15: #{tpu_custom_call.1} parent=1 // pred_check_branch
      %38 = sbr.rel (0) target = $region17
    $region16: #{tpu_custom_call.1} parent=1 // pred_region
      %39 = dma.done [#allocation3], 128
    $region17: #{tpu_custom_call.1} parent=1 // pred_fallthru
      _
    // Predicated region
    $region18: #{tpu_custom_call.1} parent=1 // pred_check
      _
    $region19: #{tpu_custom_call.1} parent=1 // pred_check_branch
      %41 = sbr.rel (0) target = $region21
    $region20: #{tpu_custom_call.1} parent=1 // pred_region
      %42 = dma.done [#allocation6], 1024
    $region21: #{tpu_custom_call.1} parent=1 // pred_fallthru
      _
    %v44 = vld [vmem:[#allocation2] sm:$0xf]
    %v45 = vld [vmem:[#allocation2 + $0x4] sm:$0xf]
    %v46 = vld [vmem:[#allocation5] sm:$0xf]
    %v47 = vld [vmem:[#allocation5 + $0x4] sm:$0xf]
    %v48 = vld [vmem:[#allocation5 + $0x8] sm:$0xf]
    %v49 = vld [vmem:[#allocation5 + $0xc] sm:$0xf]
    %v50 = vld [vmem:[#allocation5 + $0x10] sm:$0xf]
    %v51 = vld [vmem:[#allocation5 + $0x14] sm:$0xf]
    %v52 = vld [vmem:[#allocation5 + $0x18] sm:$0xf]
    %v53 = vld [vmem:[#allocation5 + $0x1c] sm:$0xf]
    %v54 = vld [vmem:[#allocation5 + $0x20] sm:$0xf]
    %v55 = vld [vmem:[#allocation5 + $0x24] sm:$0xf]
    %v56 = vld [vmem:[#allocation5 + $0x28] sm:$0xf]
    %v57 = vld [vmem:[#allocation5 + $0x2c] sm:$0xf]
    %v58 = vld [vmem:[#allocation5 + $0x30] sm:$0xf]
    %v59 = vld [vmem:[#allocation5 + $0x34] sm:$0xf]
    %v60 = vld [vmem:[#allocation5 + $0x38] sm:$0xf]
    %v61 = vld [vmem:[#allocation5 + $0x3c] sm:$0xf]
    %v62 = vld [vmem:[%s2] sm:$0x1]
    %v64 = vlaneseq
    %v65 = vshrl.u32 %v64, 7
    %v66 = vsub.s32 0, %v65
    %v67 = vrot.slane %v62, %v66
    %v71 = vunpack.c.l.b16 %v44
    %v72 = vunpack.c.l.b16 %v45
    %v73 = vpack.c.b16 %v72, %v71
    %v91 = vunpack.c.l.b16 %v46
    %v92 = vunpack.c.l.b16 %v47
    %v93 = vunpack.c.l.b16 %v48
    %v94 = vunpack.c.l.b16 %v49
    %v95 = vunpack.c.l.b16 %v50
    %v96 = vunpack.c.l.b16 %v51
    %v97 = vunpack.c.l.b16 %v52
    %v98 = vunpack.c.l.b16 %v53
    %v99 = vunpack.c.l.b16 %v54
    %v100 = vunpack.c.l.b16 %v55
    %v101 = vunpack.c.l.b16 %v56
    %v102 = vunpack.c.l.b16 %v57
    %v103 = vunpack.c.l.b16 %v58
    %v104 = vunpack.c.l.b16 %v59
    %v105 = vunpack.c.l.b16 %v60
    %v106 = vunpack.c.l.b16 %v61
    %v107 = vpack.c.b16 %v92, %v91
    %v108 = vpack.c.b16 %v94, %v93
    %v109 = vpack.c.b16 %v96, %v95
    %v110 = vpack.c.b16 %v98, %v97
    %v111 = vpack.c.b16 %v100, %v99
    %v112 = vpack.c.b16 %v102, %v101
    %v113 = vpack.c.b16 %v104, %v103
    %v114 = vpack.c.b16 %v106, %v105
    %123 = vmatprep.subr.bf16.mxu0 0
    %124 = vmatpush1.bf16.msra.mxu0 %v114
    %125 = vmatprep.subr.bf16.mxu0 0
    %126 = vmatpush1.bf16.msra.mxu0 %v113
    %127 = vmatprep.subr.bf16.mxu0 0
    %128 = vmatpush1.bf16.msra.mxu0 %v112
    %129 = vmatprep.subr.bf16.mxu0 0
    %130 = vmatpush1.bf16.msra.mxu0 %v111
    %131 = vmatprep.subr.bf16.mxu0 0
    %132 = vmatpush1.bf16.msra.mxu0 %v110
    %133 = vmatprep.subr.bf16.mxu0 0
    %134 = vmatpush1.bf16.msra.mxu0 %v109
    %135 = vmatprep.subr.bf16.mxu0 0
    %136 = vmatpush1.bf16.msra.mxu0 %v108
    %137 = vmatprep.subr.bf16.mxu0 0
    %138 = vmatpush1.bf16.msra.mxu0 %v107
    %139 = vmatprep.subr.bf16.mxu0 0
    %140 = vmatpush2.bf16.msra.mxu0 0
    %141 = vmatprep.subr.bf16.mxu0 0
    %142 = vmatpush2.bf16.msra.mxu0 0
    %143 = vmatprep.subr.bf16.mxu0 0
    %144 = vmatpush2.bf16.msra.mxu0 0
    %145 = vmatprep.subr.bf16.mxu0 0
    %146 = vmatpush2.bf16.msra.mxu0 0
    %147 = vmatprep.subr.bf16.mxu0 0
    %148 = vmatpush2.bf16.msra.mxu0 0
    %149 = vmatprep.subr.bf16.mxu0 0
    %150 = vmatpush2.bf16.msra.mxu0 0
    %151 = vmatprep.subr.bf16.mxu0 0
    %152 = vmatpush2.bf16.msra.mxu0 0
    %153 = vmatprep.subr.bf16.mxu0 0
    %154 = vmatpush2.bf16.msra.mxu0 0
    %155 = vmatprep.mubr.bf16.mxu0 0
    %156 = vmatmul.mubr.bf16.gmra.mxu0 %v73
    %v157 = vpop.f32.mrf.mxu0
    %v158 = vadd.f32 %v67, %v157
    %v159 = vpop.f32.mrf.mxu0
    %v160 = vpop.f32.mrf.mxu0
    %v161 = vadd.f32 %v67, %v160
    %v162 = vpop.f32.mrf.mxu0
    %163 = vdwg.mxu0
    %vm164 = vcmp.gt.f32.partialorder %v158, 0.0
    %vm165 = vcmp.gt.f32.partialorder %v161, 0.0
    %v166 = vmul.f32 %v158, 0.01
    %v167 = vmul.f32 %v161, 0.01
    %v168 = vsel %vm164, %v158, %v166
    %v169 = vsel %vm165, %v161, %v167
    %v170 = vpack.c.bf16 %v169, %v168
    %v172 = vunpack.c.l.b16 %v170
    %v173 = vunpack.c.h.b16 %v170
    %v174 = vpack.c.b16 %v172, %v172
    %v175 = vpack.c.b16 %v173, %v173
    %178 = vst [vmem:[#allocation7] sm:$0xf] %v174
    %179 = vst [vmem:[#allocation7 + $0x4] sm:$0xf] %v175
    // Predicated region
    $region22: #{tpu_custom_call.1} parent=1 // pred_check
      _
    $region23: #{tpu_custom_call.1} parent=1 // pred_check_branch
      %181 = sbr.rel (0) target = $region25
    $region24: #{tpu_custom_call.1} parent=1 // pred_region
      %s183 = ssub.s32 128, 128
      %184 = vsyncadd [#allocation4], %s183
      %s185 = sshll.u32 [#allocation7], 4
      %s186 = int_to_ptr.vmem [resolvable:$true] %s185
      %191 = dma.vmem_to_hbm [thread:$0]  %s186, 128, %s3, [#allocation4], 64, 64, 4
    $region25: #{tpu_custom_call.1} parent=1 // pred_fallthru
      _
    // Predicated region
    $region26: #{tpu_custom_call.1} parent=1 // pred_check
      _
    $region27: #{tpu_custom_call.1} parent=1 // pred_check_branch
      %193 = sbr.rel (0) target = $region29
    $region28: #{tpu_custom_call.1} parent=1 // pred_region
      %194 = dma.done [#allocation4], 128
    $region29: #{tpu_custom_call.1} parent=1 // pred_fallthru
      _
    %195 = vsyncpa [#allocation3], 1
    %196 = vsyncpa [#allocation6], 1
    %197 = vsyncpa [#allocation4], 1

</llo_original>
